<compile_context>
chip_gen: v7x
topology: tpu7x:2x2x1
jax: 0.10.0
libtpu: 0.0.40
codegen_flags: <defaults>
</compile_context>

<pallas_src>
import functools

import jax
import jax.numpy as jnp
from jax.experimental import pallas as pl
from jax.experimental.pallas import tpu as pltpu

HIDDEN = 100        # nn.Linear(in_dim, 100)
HIDDEN_PAD = 128    # lane-aligned hidden width used inside the kernel
TB_MAX = 4096       # batch-tile cap (review: 2048-4096, VMEM permitting)


def _round_up(x, m):
    return (x + m - 1) // m * m


def _vmem_capacity_bytes():
    """Physical VMEM per TensorCore; falls back to the smallest (v7x) value."""
    try:
        return int(pltpu.get_tpu_info().vmem_capacity_bytes)
    except Exception:
        return 64 * 1024 * 1024


def mlp_kernel(x_ref, w1_ref, b1_ref, w2_ref, b2_ref, o_ref):
    # layer1: x @ W1 + b1, sigmoid.  Padded hidden columns get sigmoid(0)=0.5,
    # but the corresponding rows of W2 are zero so they do not affect layer2.
    h = jnp.dot(x_ref[...], w1_ref[...], preferred_element_type=jnp.float32)
    h = jax.nn.sigmoid(h + b1_ref[...])              # (TB,128) + (1,128) broadcast
    # layer2: h @ W2 + b2, tanh (on the true out_dim lanes only)
    o = jnp.dot(h, w2_ref[...], preferred_element_type=jnp.float32)
    o = o + b2_ref[...]                              # (TB,out_dim) + (1,out_dim)
    o_ref[...] = jnp.tanh(o).astype(o_ref.dtype)


def prepare_params(w1, b1, w2, b2):
    """Pad the parameters ONCE at setup (hoisted out of the per-call path).

    w1: (in_dim, 100), b1: (1, 100) or (100,)
    w2: (100, out_dim), b2: (1, out_dim) or (out_dim,)
    Only the hidden axis is padded 100 -> 128; the output axis stays exact.
    """
    in_dim, hidden = w1.shape
    out_dim = w2.shape[1]
    w1p = jnp.zeros((in_dim, HIDDEN_PAD), jnp.float32).at[:, :hidden].set(w1)
    b1p = jnp.zeros((1, HIDDEN_PAD), jnp.float32).at[:, :hidden].set(
        jnp.asarray(b1, jnp.float32).reshape(1, hidden))
    w2p = jnp.zeros((HIDDEN_PAD, out_dim), jnp.float32).at[:hidden, :].set(w2)
    b2p = jnp.asarray(b2, jnp.float32).reshape(1, out_dim)
    return w1p, b1p, w2p, b2p


@jax.jit
def logistic_regression_base(x, w1p, b1p, w2p, b2p):
    """Forward pass. Takes params already padded by prepare_params()."""
    B, in_dim = x.shape
    _, out_dim = w2p.shape

    weight_bytes = (w1p.size + b1p.size + w2p.size + b2p.size) * 4
    # Pallas double-buffers every input by default, including the grid-resident
    # weights (index_map is constant) -> count them twice in the budget.
    resident_bytes = 2 * weight_bytes

    # Generation-aware VMEM target: ~24 MiB on v7x (64 MiB/TC physical),
    # ~40 MiB on v5e/v6e (128 MiB physical).
    vmem_cap = _vmem_capacity_bytes()
    budget = min(40 * 1024 * 1024, (vmem_cap * 3) // 8)

    # Per-row VMEM cost: double-buffered x tile + double-buffered out tile.
    row_bytes = 2 * (in_dim + out_dim) * 4
    tb_fit = (budget - resident_bytes) // row_bytes
    tb_fit = max(8, min(TB_MAX, (tb_fit // 8) * 8))

    # Balanced tiles: keep the batch pad tiny (< 8 rows/tile) and keep >= 2
    # grid steps for moderate/large B so both v7x TensorCores get work.
    n_tiles = pl.cdiv(B, tb_fit)
    if n_tiles == 1 and B >= 128:
        n_tiles = 2
    TB = max(8, min(tb_fit, _round_up(pl.cdiv(B, n_tiles), 8)))

    B_pad = _round_up(B, TB)
    if B_pad != B:
        x = jnp.pad(x, ((0, B_pad - B), (0, 0)))
    grid = (B_pad // TB,)

    vmem_needed = 2 * TB * (in_dim + out_dim) * 4 + resident_bytes
    vmem_limit = int(min((vmem_cap * 3) // 4,
                         max(32 * 1024 * 1024, 2 * vmem_needed)))

    cost = pl.CostEstimate(
        flops=2 * B_pad * (in_dim * HIDDEN_PAD + HIDDEN_PAD * out_dim),
        transcendentals=B_pad * (HIDDEN_PAD + out_dim),
        bytes_accessed=B_pad * (in_dim + out_dim) * 4 + weight_bytes,
    )

    out = pl.pallas_call(
        mlp_kernel,
        out_shape=jax.ShapeDtypeStruct((B_pad, out_dim), jnp.float32),
        grid_spec=pltpu.PrefetchScalarGridSpec(
            num_scalar_prefetch=0,
            grid=grid,
            in_specs=[
                pl.BlockSpec((TB, in_dim), lambda i: (i, 0)),           # x tile
                pl.BlockSpec((in_dim, HIDDEN_PAD), lambda i: (0, 0)),   # W1 resident
                pl.BlockSpec((1, HIDDEN_PAD), lambda i: (0, 0)),        # b1 resident
                pl.BlockSpec((HIDDEN_PAD, out_dim), lambda i: (0, 0)),  # W2 resident
                pl.BlockSpec((1, out_dim), lambda i: (0, 0)),           # b2 resident
            ],
            out_specs=pl.BlockSpec((TB, out_dim), lambda i: (i, 0)),    # unpadded lanes
        ),
        compiler_params=pltpu.CompilerParams(
            dimension_semantics=("parallel",),
            vmem_limit_bytes=vmem_limit,
        ),
        cost_estimate=cost,
    )(x, w1p, b1p, w2p, b2p)

    return out[:B]


def init_params(key, in_dim, out_dim):
    """Deterministic init matching PyTorch nn.Linear default (uniform +/-1/sqrt(fan_in))."""
    k1, k2, k3, k4 = jax.random.split(key, 4)
    lim1 = 1.0 / jnp.sqrt(jnp.float32(in_dim))
    lim2 = 1.0 / jnp.sqrt(jnp.float32(HIDDEN))
    w1 = jax.random.uniform(k1, (in_dim, HIDDEN), jnp.float32, -lim1, lim1)
    b1 = jax.random.uniform(k2, (1, HIDDEN), jnp.float32, -lim1, lim1)
    w2 = jax.random.uniform(k3, (HIDDEN, out_dim), jnp.float32, -lim2, lim2)
    b2 = jax.random.uniform(k4, (1, out_dim), jnp.float32, -lim2, lim2)
    return w1, b1, w2, b2


def reference(x, w1, b1, w2, b2):
    h = jax.nn.sigmoid(x @ w1 + b1)
    return jnp.tanh(h @ w2 + b2)


if __name__ == "__main__":
    key = jax.random.PRNGKey(0)
    kx, kp = jax.random.split(key)

    batch, in_dim, out_dim = 8, 32, 16
    x = jax.random.normal(kx, (batch, in_dim), jnp.float32)
    w1, b1, w2, b2 = init_params(kp, in_dim, out_dim)

    # One-time setup: pad weights to the lane-aligned layout the kernel uses.
    params = prepare_params(w1, b1, w2, b2)

    out = logistic_regression_base(x, *params)
    out = jax.block_until_ready(out)

    ref = reference(x, w1, b1, w2, b2)
    assert out.shape == (batch, out_dim)
    assert jnp.allclose(out, ref, atol=1e-5, rtol=1e-5)

    # also sanity-check a batch that exercises multiple grid steps + ragged pad
    xb = jax.random.normal(kx, (1037, in_dim), jnp.float32)
    outb = jax.block_until_ready(logistic_regression_base(xb, *params))
    refb = reference(xb, w1, b1, w2, b2)
    assert outb.shape == (1037, out_dim)
    assert jnp.allclose(outb, refb, atol=1e-5, rtol=1e-5)

    print("KERNEL_OK")
</pallas_src>

<mosaic_0001>
module attributes {stable_mosaic.version = 11 : i64} {
  func.func @mlp_kernel(%arg0: i32, %arg1: memref<8x32xf32, #tpu.memory_space<vmem>>, %arg2: memref<32x128xf32, #tpu.memory_space<vmem>>, %arg3: memref<1x128xf32, #tpu.memory_space<vmem>>, %arg4: memref<128x16xf32, #tpu.memory_space<vmem>>, %arg5: memref<1x16xf32, #tpu.memory_space<vmem>>, %arg6: memref<8x16xf32, #tpu.memory_space<vmem>>) attributes {dimension_semantics = [#tpu.dimension_semantics<parallel>], iteration_bounds = array<i64: 1>, scalar_prefetch = 0 : i64, scratch_operands = 0 : i64, tpu.core_type = #tpu.core_type<tc>, window_params = [{transform_indices = @transform_0, window_bounds = array<i64: 8, 32>}, {pipeline_mode = #tpu.pipeline_mode<synchronous>, transform_indices = @transform_1, window_bounds = array<i64: 32, 128>}, {pipeline_mode = #tpu.pipeline_mode<synchronous>, transform_indices = @transform_2, window_bounds = array<i64: 1, 128>}, {pipeline_mode = #tpu.pipeline_mode<synchronous>, transform_indices = @transform_3, window_bounds = array<i64: 128, 16>}, {pipeline_mode = #tpu.pipeline_mode<synchronous>, transform_indices = @transform_4, window_bounds = array<i64: 1, 16>}, {transform_indices = @transform_5, window_bounds = array<i64: 8, 16>}]} {
    %c0 = arith.constant 0 : index
    %c0_0 = arith.constant 0 : index
    %0 = vector.load %arg1[%c0, %c0_0] : memref<8x32xf32, #tpu.memory_space<vmem>>, vector<8x32xf32>
    %c0_1 = arith.constant 0 : index
    %c0_2 = arith.constant 0 : index
    %1 = vector.load %arg2[%c0_1, %c0_2] : memref<32x128xf32, #tpu.memory_space<vmem>>, vector<32x128xf32>
    %cst = arith.constant dense<0.000000e+00> : vector<8x128xf32>
    %2 = tpu.matmul %0, %1, %cst {dimension_numbers = #tpu.dot_dimension_numbers<[1], [0], [0], [1], [0, 0, 1, 1], [], []>} : vector<8x32xf32>, vector<32x128xf32>, vector<8x128xf32> -> vector<8x128xf32>
    %c0_3 = arith.constant 0 : index
    %c0_4 = arith.constant 0 : index
    %3 = vector.load %arg3[%c0_3, %c0_4] : memref<1x128xf32, #tpu.memory_space<vmem>>, vector<1x128xf32>
    %4 = vector.broadcast %3 : vector<1x128xf32> to vector<8x128xf32>
    %5 = arith.addf %2, %4 : vector<8x128xf32>
    %6 = arith.negf %5 : vector<8x128xf32>
    %7 = math.exp %6 : vector<8x128xf32>
    %cst_5 = arith.constant 1.000000e+00 : f32
    %8 = vector.broadcast %cst_5 : f32 to vector<8x128xf32>
    %9 = arith.addf %8, %7 : vector<8x128xf32>
    %10 = arith.divf %8, %9 : vector<8x128xf32>
    %c0_6 = arith.constant 0 : index
    %c0_7 = arith.constant 0 : index
    %11 = vector.load %arg4[%c0_6, %c0_7] : memref<128x16xf32, #tpu.memory_space<vmem>>, vector<128x16xf32>
    %cst_8 = arith.constant dense<0.000000e+00> : vector<8x16xf32>
    %12 = tpu.matmul %10, %11, %cst_8 {dimension_numbers = #tpu.dot_dimension_numbers<[1], [0], [0], [1], [0, 0, 1, 1], [], []>} : vector<8x128xf32>, vector<128x16xf32>, vector<8x16xf32> -> vector<8x16xf32>
    %c0_9 = arith.constant 0 : index
    %c0_10 = arith.constant 0 : index
    %13 = vector.load %arg5[%c0_9, %c0_10] : memref<1x16xf32, #tpu.memory_space<vmem>>, vector<1x16xf32>
    %14 = vector.broadcast %13 : vector<1x16xf32> to vector<8x16xf32>
    %15 = arith.addf %12, %14 : vector<8x16xf32>
    %16 = math.tanh %15 : vector<8x16xf32>
    %c0_11 = arith.constant 0 : index
    %c0_12 = arith.constant 0 : index
    %17 = vector.load %arg6[%c0_11, %c0_12] : memref<8x16xf32, #tpu.memory_space<vmem>>, vector<8x16xf32>
    tpu.vector_store %arg6[%c0_11, %c0_12], %16 {strides = array<i32>} : memref<8x16xf32, #tpu.memory_space<vmem>>, vector<8x16xf32>,
    return
  }
  func.func @transform_0(%arg0: i32) -> (i32, i32) {
    %c0_i32 = arith.constant 0 : i32
    %c0_i32_0 = arith.constant 0 : i32
    return %arg0, %c0_i32 : i32, i32
  }
  func.func @transform_1(%arg0: i32) -> (i32, i32) {
    %c0_i32 = arith.constant 0 : i32
    %c0_i32_0 = arith.constant 0 : i32
    %c0_i32_1 = arith.constant 0 : i32
    return %c0_i32, %c0_i32_0 : i32, i32
  }
  func.func @transform_2(%arg0: i32) -> (i32, i32) {
    %c0_i32 = arith.constant 0 : i32
    %c0_i32_0 = arith.constant 0 : i32
    %c0_i32_1 = arith.constant 0 : i32
    return %c0_i32, %c0_i32_0 : i32, i32
  }
  func.func @transform_3(%arg0: i32) -> (i32, i32) {
    %c0_i32 = arith.constant 0 : i32
    %c0_i32_0 = arith.constant 0 : i32
    %c0_i32_1 = arith.constant 0 : i32
    return %c0_i32, %c0_i32_0 : i32, i32
  }
  func.func @transform_4(%arg0: i32) -> (i32, i32) {
    %c0_i32 = arith.constant 0 : i32
    %c0_i32_0 = arith.constant 0 : i32
    %c0_i32_1 = arith.constant 0 : i32
    return %c0_i32, %c0_i32_0 : i32, i32
  }
  func.func @transform_5(%arg0: i32) -> (i32, i32) {
    %c0_i32 = arith.constant 0 : i32
    %c0_i32_0 = arith.constant 0 : i32
    return %arg0, %c0_i32 : i32, i32
  }
}

</mosaic_0001>

<llo_original>
// kernel: logistic_regression_base.1
$region0: #{logistic_regression_base.1}
  #allocation0 [shape = 'u32[]', space=smem, size = 0x4, offset = 0x4, fixed_abs, tag = 'smem constant byte address 0x4 - core index']
  #allocation1 [shape = 'u32[144,128]{1,0:T(1,128)}', space=vmem, size = 0x12000, scoped, tag = 'internal scratch']
  %s0 = inlined_call_operand.vmem [shape: f32[8,32], index: 0, kind: input, shape index: {}]
  %s1 = inlined_call_operand.vmem [shape: f32[32,128], index: 1, kind: input, shape index: {}]
  %s2 = inlined_call_operand.vmem [shape: f32[1,128], index: 2, kind: input, shape index: {}]
  %s3 = inlined_call_operand.vmem [shape: f32[128,16], index: 3, kind: input, shape index: {}]
  %s4 = inlined_call_operand.vmem [shape: f32[1,16], index: 4, kind: input, shape index: {}]
  %s5 = inlined_call_operand.hbm [shape: f32[8,16], index: 5, kind: output, shape index: {}]
  %s6 = sld [smem:[#allocation0]]
  $region30: #{logistic_regression_base.1} parent=0
    _
  %s8 = ssub.s32 1, %s6
  %s9 = scalar_select 0, %s8, %s6
  $region1: #{logistic_regression_base.1} parent=0
    #allocation2 [shape = 'u8[4096]{0}', space=vmem, size = 0x1000, scoped, tag = 'output window, operand 0, single buffered']
    #allocation3 [shape = 's32[1]{0}', space=sflag, size = 0x4, scoped, tag = 'scoped memory for logistic_regression_base.1']
    %10 = vsyncpa [#allocation3], 0
    // Predicated region
    $region2: #{logistic_regression_base.1} parent=1 // pred_check
      _
    $region3: #{logistic_regression_base.1} parent=1 // pred_check_branch
      %12 = sbr.rel (0) target = $region5
    $region4: #{logistic_regression_base.1} parent=1 // pred_region
      _
    $region5: #{logistic_regression_base.1} parent=1 // pred_fallthru
      _
    // Predicated region
    $region6: #{logistic_regression_base.1} parent=1 // pred_check
      _
    $region7: #{logistic_regression_base.1} parent=1 // pred_check_branch
      %14 = sbr.rel (0) target = $region9
    $region8: #{logistic_regression_base.1} parent=1 // pred_region
      _
    $region9: #{logistic_regression_base.1} parent=1 // pred_fallthru
      _
    // Predicated region
    $region10: #{logistic_regression_base.1} parent=1 // pred_check
      _
    $region11: #{logistic_regression_base.1} parent=1 // pred_check_branch
      %16 = sbr.rel (0) target = $region13
    $region12: #{logistic_regression_base.1} parent=1 // pred_region
      _
    $region13: #{logistic_regression_base.1} parent=1 // pred_fallthru
      _
    // Predicated region
    $region14: #{logistic_regression_base.1} parent=1 // pred_check
      _
    $region15: #{logistic_regression_base.1} parent=1 // pred_check_branch
      %18 = sbr.rel (0) target = $region17
    $region16: #{logistic_regression_base.1} parent=1 // pred_region
      _
    $region17: #{logistic_regression_base.1} parent=1 // pred_fallthru
      _
    // Predicated region
    $region18: #{logistic_regression_base.1} parent=1 // pred_check
      _
    $region19: #{logistic_regression_base.1} parent=1 // pred_check_branch
      %20 = sbr.rel (0) target = $region21
    $region20: #{logistic_regression_base.1} parent=1 // pred_region
      _
    $region21: #{logistic_regression_base.1} parent=1 // pred_fallthru
      _
    %v21 = vld [vmem:[%s0] sm:$0xff]
    %v22 = vld [vmem:[%s1] sm:$0xff]
    %v23 = vld [vmem:[%s1 + $0x8] sm:$0xff]
    %v24 = vld [vmem:[%s1 + $0x10] sm:$0xff]
    %v25 = vld [vmem:[%s1 + $0x18] sm:$0xff]
    %v26 = vld [vmem:[%s2] sm:$0x1]
    %v28 = vlaneseq
    %v29 = vshrl.u32 %v28, 7
    %v30 = vsub.s32 0, %v29
    %v31 = vrot.slane %v26, %v30
    %vm33 = vcmask 261120
    %v35 = vsel %vm33, %v21, 0
    %37 = vmatprep.subr.mxu0 0.0
    %38 = vmatpush1.msra.mxu0 %v22
    %39 = vmatprep.subr.mxu0 0.0
    %40 = vmatpush1.msra.mxu0 %v23
    %41 = vmatprep.subr.mxu0 0.0
    %42 = vmatpush1.msra.mxu0 %v24
    %43 = vmatprep.subr.mxu0 0.0
    %44 = vmatpush1.msra.mxu0 %v25
    %45 = vmatprep.subr.mxu0 0.0
    %46 = vmatpush1.msra.mxu0 0.0
    %47 = vmatprep.subr.mxu0 0.0
    %48 = vmatpush1.msra.mxu0 0.0
    %49 = vmatprep.subr.mxu0 0.0
    %50 = vmatpush1.msra.mxu0 0.0
    %51 = vmatprep.subr.mxu0 0.0
    %52 = vmatpush1.msra.mxu0 0.0
    %53 = vmatprep.subr.mxu0 0.0
    %54 = vmatpush1.msra.mxu0 0.0
    %55 = vmatprep.subr.mxu0 0.0
    %56 = vmatpush1.msra.mxu0 0.0
    %57 = vmatprep.subr.mxu0 0.0
    %58 = vmatpush1.msra.mxu0 0.0
    %59 = vmatprep.subr.mxu0 0.0
    %60 = vmatpush1.msra.mxu0 0.0
    %61 = vmatprep.subr.mxu0 0.0
    %62 = vmatpush1.msra.mxu0 0.0
    %63 = vmatprep.subr.mxu0 0.0
    %64 = vmatpush1.msra.mxu0 0.0
    %65 = vmatprep.subr.mxu0 0.0
    %66 = vmatpush1.msra.mxu0 0.0
    %67 = vmatprep.subr.mxu0 0.0
    %68 = vmatpush1.msra.mxu0 0.0
    %69 = vmatprep.subr.mxu0 0.0
    %70 = vmatpush1.msra.mxu0 0.0
    %71 = vmatprep.subr.mxu0 0.0
    %72 = vmatpush1.msra.mxu0 0.0
    %73 = vmatprep.subr.mxu0 0.0
    %74 = vmatpush1.msra.mxu0 0.0
    %75 = vmatprep.subr.mxu0 0.0
    %76 = vmatpush1.msra.mxu0 0.0
    %77 = vmatprep.subr.mxu0 0.0
    %78 = vmatpush1.msra.mxu0 0.0
    %79 = vmatprep.subr.mxu0 0.0
    %80 = vmatpush1.msra.mxu0 0.0
    %81 = vmatprep.subr.mxu0 0.0
    %82 = vmatpush1.msra.mxu0 0.0
    %83 = vmatprep.subr.mxu0 0.0
    %84 = vmatpush1.msra.mxu0 0.0
    %85 = vmatprep.subr.mxu0 0.0
    %86 = vmatpush1.msra.mxu0 0.0
    %87 = vmatprep.subr.mxu0 0.0
    %88 = vmatpush1.msra.mxu0 0.0
    %89 = vmatprep.subr.mxu0 0.0
    %90 = vmatpush1.msra.mxu0 0.0
    %91 = vmatprep.subr.mxu0 0.0
    %92 = vmatpush1.msra.mxu0 0.0
    %93 = vmatprep.subr.mxu0 0.0
    %94 = vmatpush1.msra.mxu0 0.0
    %95 = vmatprep.subr.mxu0 0.0
    %96 = vmatpush1.msra.mxu0 0.0
    %97 = vmatprep.subr.mxu0 0.0
    %98 = vmatpush1.msra.mxu0 0.0
    %99 = vmatprep.subr.mxu0 0.0
    %100 = vmatpush1.msra.mxu0 0.0
    %101 = vmatprep.mubr.f32.mxu0 0.0
    %102 = vmatmul.mubr.f32.gmra.mrb[0].mxu0 %v35
    %v103 = vpop.f32.mrb[0].mxu0
    %v104 = vadd.f32 %v31, %v103
    %v105 = vpop.f32.mrb[0].mxu0
    %106 = vdwg.mxu0
    %v107 = vxor.u32 %v104, 2147483648
    %v108 = vmul.f32 %v107, 1.442695
    %v109 = vpow.pop %v108
    %v110 = vadd.f32 %v109, 1.0
    %v111 = vrcp.pop %v110
    %v112 = vmul.f32 1.0, %v111
    %v113 = vld [vmem:[%s3] sm:$0xff]
    %v114 = vld [vmem:[%s3 + $0x8] sm:$0xff]
    %v115 = vld [vmem:[%s3 + $0x10] sm:$0xff]
    %v116 = vld [vmem:[%s3 + $0x18] sm:$0xff]
    %v117 = vld [vmem:[%s3 + $0x20] sm:$0xff]
    %v118 = vld [vmem:[%s3 + $0x28] sm:$0xff]
    %v119 = vld [vmem:[%s3 + $0x30] sm:$0xff]
    %v120 = vld [vmem:[%s3 + $0x38] sm:$0xff]
    %v121 = vld [vmem:[%s3 + $0x40] sm:$0xff]
    %v122 = vld [vmem:[%s3 + $0x48] sm:$0xff]
    %v123 = vld [vmem:[%s3 + $0x50] sm:$0xff]
    %v124 = vld [vmem:[%s3 + $0x58] sm:$0xff]
    %v125 = vld [vmem:[%s3 + $0x60] sm:$0xff]
    %v126 = vld [vmem:[%s3 + $0x68] sm:$0xff]
    %v127 = vld [vmem:[%s3 + $0x70] sm:$0xff]
    %v128 = vld [vmem:[%s3 + $0x78] sm:$0xff]
    %v129 = vld [vmem:[%s4] sm:$0x1]
    %v131 = vlaneseq
    %v132 = vshrl.u32 %v131, 7
    %v133 = vsub.s32 0, %v132
    %v134 = vrot.slane %v129, %v133
    %136 = vmatprep.subr.mxu0 0.0
    %137 = vmatpush1.msra.mxu0 %v113
    %138 = vmatprep.subr.mxu0 0.0
    %139 = vmatpush1.msra.mxu0 %v114
    %140 = vmatprep.subr.mxu0 0.0
    %141 = vmatpush1.msra.mxu0 %v115
    %142 = vmatprep.subr.mxu0 0.0
    %143 = vmatpush1.msra.mxu0 %v116
    %144 = vmatprep.subr.mxu0 0.0
    %145 = vmatpush1.msra.mxu0 %v117
    %146 = vmatprep.subr.mxu0 0.0
    %147 = vmatpush1.msra.mxu0 %v118
    %148 = vmatprep.subr.mxu0 0.0
    %149 = vmatpush1.msra.mxu0 %v119
    %150 = vmatprep.subr.mxu0 0.0
    %151 = vmatpush1.msra.mxu0 %v120
    %152 = vmatprep.subr.mxu0 0.0
    %153 = vmatpush1.msra.mxu0 %v121
    %154 = vmatprep.subr.mxu0 0.0
    %155 = vmatpush1.msra.mxu0 %v122
    %156 = vmatprep.subr.mxu0 0.0
    %157 = vmatpush1.msra.mxu0 %v123
    %158 = vmatprep.subr.mxu0 0.0
    %159 = vmatpush1.msra.mxu0 %v124
    %160 = vmatprep.subr.mxu0 0.0
    %161 = vmatpush1.msra.mxu0 %v125
    %162 = vmatprep.subr.mxu0 0.0
    %163 = vmatpush1.msra.mxu0 %v126
    %164 = vmatprep.subr.mxu0 0.0
    %165 = vmatpush1.msra.mxu0 %v127
    %166 = vmatprep.subr.mxu0 0.0
    %167 = vmatpush1.msra.mxu0 %v128
    %168 = vmatprep.subr.mxu0 0.0
    %169 = vmatpush1.msra.mxu0 0.0
    %170 = vmatprep.subr.mxu0 0.0
    %171 = vmatpush1.msra.mxu0 0.0
    %172 = vmatprep.subr.mxu0 0.0
    %173 = vmatpush1.msra.mxu0 0.0
    %174 = vmatprep.subr.mxu0 0.0
    %175 = vmatpush1.msra.mxu0 0.0
    %176 = vmatprep.subr.mxu0 0.0
    %177 = vmatpush1.msra.mxu0 0.0
    %178 = vmatprep.subr.mxu0 0.0
    %179 = vmatpush1.msra.mxu0 0.0
    %180 = vmatprep.subr.mxu0 0.0
    %181 = vmatpush1.msra.mxu0 0.0
    %182 = vmatprep.subr.mxu0 0.0
    %183 = vmatpush1.msra.mxu0 0.0
    %184 = vmatprep.subr.mxu0 0.0
    %185 = vmatpush1.msra.mxu0 0.0
    %186 = vmatprep.subr.mxu0 0.0
    %187 = vmatpush1.msra.mxu0 0.0
    %188 = vmatprep.subr.mxu0 0.0
    %189 = vmatpush1.msra.mxu0 0.0
    %190 = vmatprep.subr.mxu0 0.0
    %191 = vmatpush1.msra.mxu0 0.0
    %192 = vmatprep.subr.mxu0 0.0
    %193 = vmatpush1.msra.mxu0 0.0
    %194 = vmatprep.subr.mxu0 0.0
    %195 = vmatpush1.msra.mxu0 0.0
    %196 = vmatprep.subr.mxu0 0.0
    %197 = vmatpush1.msra.mxu0 0.0
    %198 = vmatprep.subr.mxu0 0.0
    %199 = vmatpush1.msra.mxu0 0.0
    %200 = vmatprep.mubr.f32.mxu0 0.0
    %201 = vmatmul.mubr.f32.gmra.mrb[0].mxu0 %v112
    %v202 = vpop.f32.mrb[0].mxu0
    %v203 = vadd.f32 %v134, %v202
    %v204 = vpop.f32.mrb[0].mxu0
    %205 = vdwg.mxu0
    %v206 = vtanh.pop %v203
    %vm207 = vcmask 130048
    %208 = vst.msk [vmem:[#allocation2] sm:$0xff] %vm207, %v206
    // Predicated region
    $region22: #{logistic_regression_base.1} parent=1 // pred_check
      _
    $region23: #{logistic_regression_base.1} parent=1 // pred_check_branch
      %210 = sbr.rel (0) target = $region25
    $region24: #{logistic_regression_base.1} parent=1 // pred_region
      %s212 = ssub.s32 128, 128
      %213 = vsyncadd [#allocation3], %s212
      %s215 = sshll.u32 [#allocation2], 4
      %s216 = int_to_ptr.vmem [resolvable:$true] %s215
      %218 = dma.vmem_to_hbm [thread:$0]  %s216, 128, %s5, [#allocation3]
    $region25: #{logistic_regression_base.1} parent=1 // pred_fallthru
      _
    // Predicated region
    $region26: #{logistic_regression_base.1} parent=1 // pred_check
      _
    $region27: #{logistic_regression_base.1} parent=1 // pred_check_branch
      %220 = sbr.rel (0) target = $region29
    $region28: #{logistic_regression_base.1} parent=1 // pred_region
      %221 = dma.done [#allocation3], 128
    $region29: #{logistic_regression_base.1} parent=1 // pred_fallthru
      _
    %222 = vsyncpa [#allocation3], 1

</llo_original>
